<compile_context>
chip_gen: v5e
topology: v5e:2x2
jax: 0.10.0
libtpu: 0.0.40
codegen_flags: <defaults>
</compile_context>

<pallas_src>
import functools

import jax
import jax.numpy as jnp
from jax.experimental import pallas as pl
from jax.experimental.pallas import tpu as pltpu

_LANE = 128


def _layernorm_kernel(x_ref, gamma_ref, beta_ref, o_ref, *, eps):
    # x_ref: (block_b, n_neurons) tile in VMEM. Mosaic handles lane padding
    # internally when n_neurons % 128 != 0, so plain reductions are exact.
    x = x_ref[...].astype(jnp.float32)
    mu = jnp.mean(x, axis=-1, keepdims=True)                      # (tb, 1)
    centered = x - mu
    var = jnp.mean(centered * centered, axis=-1, keepdims=True)   # biased var
    inv_std = jax.lax.rsqrt(var + eps)                            # (tb, 1)

    gamma = gamma_ref[...].astype(jnp.float32)                    # (1, H)
    beta = beta_ref[...].astype(jnp.float32)                      # (1, H)

    # hat = centered * inv_std ; out = hat * gamma + beta
    o_ref[...] = ((centered * inv_std) * gamma + beta).astype(o_ref.dtype)


def _round_up(a, b):
    return ((a + b - 1) // b) * b


def _vmem_capacity_bytes():
    try:
        return int(pltpu.get_tpu_info().vmem_capacity_bytes)
    except Exception:
        return 64 * 1024 * 1024  # conservative fallback (v7x per-TC VMEM)


def _choose_block_b(n_batch, n_neurons, dtype_bytes, sublane, vmem_cap):
    """Pick the batch tile by target block bytes, not a fixed row cap."""
    row_bytes = max(n_neurons * dtype_bytes, 1)
    if vmem_cap <= (64 << 20):           # v7x: 64 MiB per TensorCore
        target_block_bytes = 4 << 20
    else:                                # v5e / v6e: 128 MiB
        target_block_bytes = 8 << 20
    block_b = max(sublane, target_block_bytes // row_bytes)
    block_b = max(sublane, (block_b // sublane) * sublane)
    # Prefer >= 4 grid blocks when the batch allows: both v7x TCs then get
    # >= 2 pipelined steps each (no cost on single-TC v5e/v6e).
    if n_batch >= 4 * sublane:
        quarter = _round_up(pl.cdiv(n_batch, 4), sublane)
        block_b = min(block_b, quarter)
    return block_b


def custom_layer_norm(x, gamma, beta, eps=1e-5, block_b=None):
    """LayerNorm over axis=1 of x (n_batch, n_neurons), matching the PyTorch module.

    gamma, beta: shape (n_neurons, 1), as in the nn.Module __init__.
    """
    assert x.ndim == 2, "expected (n_batch, n_neurons)"
    n_batch, n_neurons = x.shape
    assert gamma.shape == (n_neurons, 1) and beta.shape == (n_neurons, 1)

    dtype = x.dtype
    dtype_bytes = jnp.dtype(dtype).itemsize
    # Keep sub-32-bit sublane packing intact (16 rows/vreg bf16, 32 for int8).
    sublane = 8 if dtype_bytes >= 4 else (16 if dtype_bytes == 2 else 32)

    vmem_cap = _vmem_capacity_bytes()
    if block_b is None:
        block_b = _choose_block_b(n_batch, n_neurons, dtype_bytes, sublane, vmem_cap)
    block_b = int(block_b)
    if block_b >= n_batch:
        # Full-dim batch block: bypasses the sublane-divisibility rule and
        # avoids any padded rows.
        block_b = n_batch
    else:
        block_b = max(sublane, (block_b // sublane) * sublane)

    # Ragged last block: OOB rows are garbage but the reduction is row-wise
    # and OOB output rows are never written back, so valid rows are exact.
    grid = (pl.cdiv(n_batch, block_b),)

    # gamma.T / beta.T as lane-dense (1, H) rows — tiny, no HBM copies of x.
    gamma_row = gamma.reshape(1, n_neurons)
    beta_row = beta.reshape(1, n_neurons)

    # Raise the scoped VMEM limit (default 16/32 MiB) while leaving headroom
    # for Mosaic internal scratch; block sizing keeps actual usage well below.
    vmem_limit = int(vmem_cap * 9 // 10)

    # TODO(synk): extremely wide n_neurons (a single row of f32 temporaries
    # approaching the VMEM budget) would need an inner emit_pipeline over H
    # chunks; unnecessary at MLP scale.
    kernel = functools.partial(_layernorm_kernel, eps=float(eps))

    return pl.pallas_call(
        kernel,
        out_shape=jax.ShapeDtypeStruct((n_batch, n_neurons), dtype),
        grid=grid,
        in_specs=[
            pl.BlockSpec((block_b, n_neurons), lambda i: (i, 0)),
            pl.BlockSpec((1, n_neurons), lambda i: (0, 0)),
            pl.BlockSpec((1, n_neurons), lambda i: (0, 0)),
        ],
        out_specs=pl.BlockSpec((block_b, n_neurons), lambda i: (i, 0)),
        compiler_params=pltpu.CompilerParams(
            dimension_semantics=("parallel",),
            vmem_limit_bytes=vmem_limit,
        ),
    )(x, gamma_row, beta_row)


def _reference(x, gamma, beta, eps=1e-5):
    mu = jnp.mean(x, axis=1, keepdims=True)
    var = jnp.mean((x - mu) ** 2, axis=1, keepdims=True)  # unbiased=False
    hat = (x - mu) / jnp.sqrt(var + eps)
    return hat * gamma.T + beta.T


if __name__ == "__main__":
    eps = 1e-5
    key = jax.random.PRNGKey(0)
    k1, k2, k3, k4 = jax.random.split(key, 4)

    # Case 1: module-sized input (n_batch=8, n_neurons=32).
    # Exercises the full-dim (unpadded, non-128-multiple) hidden block.
    n_batch, n_neurons = 8, 32
    x = jax.random.normal(k1, (n_batch, n_neurons), dtype=jnp.float32)
    gamma = jnp.ones((n_neurons, 1), dtype=jnp.float32)   # as in __init__
    beta = jnp.zeros((n_neurons, 1), dtype=jnp.float32)
    out = jax.block_until_ready(custom_layer_norm(x, gamma, beta, eps=eps))
    ref = _reference(x, gamma, beta, eps=eps)
    assert out.shape == (n_batch, n_neurons)
    assert jnp.allclose(out, ref, atol=2e-5, rtol=2e-5), "mismatch vs reference (case 1)"

    # Case 2: multi-block grid with a ragged last batch block and non-trivial
    # gamma/beta (also tests non-128-multiple hidden with larger batch).
    n_batch, n_neurons = 200, 384
    x = 3.0 + jax.random.normal(k2, (n_batch, n_neurons), dtype=jnp.float32)
    gamma = 1.0 + 0.1 * jax.random.normal(k3, (n_neurons, 1), dtype=jnp.float32)
    beta = 0.05 * jax.random.normal(k4, (n_neurons, 1), dtype=jnp.float32)
    out = jax.block_until_ready(custom_layer_norm(x, gamma, beta, eps=eps))
    ref = _reference(x, gamma, beta, eps=eps)
    assert out.shape == (n_batch, n_neurons)
    assert jnp.allclose(out, ref, atol=2e-5, rtol=2e-5), "mismatch vs reference (case 2)"

    print("KERNEL_OK")
</pallas_src>

<mosaic_0001>
module attributes {stable_mosaic.version = 11 : i64} {
  func.func @_layernorm_kernel(%arg0: i32, %arg1: memref<8x32xf32, #tpu.memory_space<vmem>>, %arg2: memref<1x32xf32, #tpu.memory_space<vmem>>, %arg3: memref<1x32xf32, #tpu.memory_space<vmem>>, %arg4: memref<8x32xf32, #tpu.memory_space<vmem>>) attributes {dimension_semantics = [#tpu.dimension_semantics<parallel>], iteration_bounds = array<i64: 1>, scalar_prefetch = 0 : i64, scratch_operands = 0 : i64, tpu.core_type = #tpu.core_type<tc>, window_params = [{transform_indices = @transform_0, window_bounds = array<i64: 8, 32>}, {pipeline_mode = #tpu.pipeline_mode<synchronous>, transform_indices = @transform_1, window_bounds = array<i64: 1, 32>}, {pipeline_mode = #tpu.pipeline_mode<synchronous>, transform_indices = @transform_2, window_bounds = array<i64: 1, 32>}, {transform_indices = @transform_3, window_bounds = array<i64: 8, 32>}]} {
    %c0 = arith.constant 0 : index
    %c0_0 = arith.constant 0 : index
    %0 = vector.load %arg1[%c0, %c0_0] : memref<8x32xf32, #tpu.memory_space<vmem>>, vector<8x32xf32>
    %cst = arith.constant dense<0.000000e+00> : vector<8xf32>
    %1 = vector.multi_reduction <add>, %0, %cst [1] : vector<8x32xf32> to vector<8xf32>
    %2 = vector.shape_cast %1 : vector<8xf32> to vector<8x1xf32>
    %cst_1 = arith.constant 3.200000e+01 : f32
    %3 = vector.broadcast %cst_1 : f32 to vector<8x1xf32>
    %4 = arith.divf %2, %3 : vector<8x1xf32>
    %5 = vector.broadcast %4 : vector<8x1xf32> to vector<8x32xf32>
    %6 = arith.subf %0, %5 : vector<8x32xf32>
    %7 = arith.mulf %6, %6 : vector<8x32xf32>
    %cst_2 = arith.constant dense<0.000000e+00> : vector<8xf32>
    %8 = vector.multi_reduction <add>, %7, %cst_2 [1] : vector<8x32xf32> to vector<8xf32>
    %9 = vector.shape_cast %8 : vector<8xf32> to vector<8x1xf32>
    %cst_3 = arith.constant 3.200000e+01 : f32
    %10 = vector.broadcast %cst_3 : f32 to vector<8x1xf32>
    %11 = arith.divf %9, %10 : vector<8x1xf32>
    %cst_4 = arith.constant 9.99999974E-6 : f32
    %12 = vector.broadcast %cst_4 : f32 to vector<8x1xf32>
    %13 = arith.addf %11, %12 : vector<8x1xf32>
    %14 = math.rsqrt %13 : vector<8x1xf32>
    %c0_5 = arith.constant 0 : index
    %c0_6 = arith.constant 0 : index
    %15 = vector.load %arg2[%c0_5, %c0_6] : memref<1x32xf32, #tpu.memory_space<vmem>>, vector<1x32xf32>
    %c0_7 = arith.constant 0 : index
    %c0_8 = arith.constant 0 : index
    %16 = vector.load %arg3[%c0_7, %c0_8] : memref<1x32xf32, #tpu.memory_space<vmem>>, vector<1x32xf32>
    %17 = vector.broadcast %14 : vector<8x1xf32> to vector<8x32xf32>
    %18 = arith.mulf %6, %17 : vector<8x32xf32>
    %19 = vector.broadcast %15 : vector<1x32xf32> to vector<8x32xf32>
    %20 = arith.mulf %18, %19 : vector<8x32xf32>
    %21 = vector.broadcast %16 : vector<1x32xf32> to vector<8x32xf32>
    %22 = arith.addf %20, %21 : vector<8x32xf32>
    %c0_9 = arith.constant 0 : index
    %c0_10 = arith.constant 0 : index
    %23 = vector.load %arg4[%c0_9, %c0_10] : memref<8x32xf32, #tpu.memory_space<vmem>>, vector<8x32xf32>
    tpu.vector_store %arg4[%c0_9, %c0_10], %22 {strides = array<i32>} : memref<8x32xf32, #tpu.memory_space<vmem>>, vector<8x32xf32>,
    return
  }
  func.func @transform_0(%arg0: i32) -> (i32, i32) {
    %c0_i32 = arith.constant 0 : i32
    %c0_i32_0 = arith.constant 0 : i32
    return %arg0, %c0_i32 : i32, i32
  }
  func.func @transform_1(%arg0: i32) -> (i32, i32) {
    %c0_i32 = arith.constant 0 : i32
    %c0_i32_0 = arith.constant 0 : i32
    %c0_i32_1 = arith.constant 0 : i32
    return %c0_i32, %c0_i32_0 : i32, i32
  }
  func.func @transform_2(%arg0: i32) -> (i32, i32) {
    %c0_i32 = arith.constant 0 : i32
    %c0_i32_0 = arith.constant 0 : i32
    %c0_i32_1 = arith.constant 0 : i32
    return %c0_i32, %c0_i32_0 : i32, i32
  }
  func.func @transform_3(%arg0: i32) -> (i32, i32) {
    %c0_i32 = arith.constant 0 : i32
    %c0_i32_0 = arith.constant 0 : i32
    return %arg0, %c0_i32 : i32, i32
  }
}

</mosaic_0001>

<llo_original>
// kernel: tpu_custom_call.1
$region0: #{tpu_custom_call.1}
  #allocation0 [shape = 'u32[]', space=smem, size = 0x4, offset = 0x4, fixed_abs, tag = 'smem constant byte address 0x4 - core index']
  #allocation1 [shape = 'u32[72,128]{1,0:T(1,128)}', space=vmem, size = 0x9000, scoped, tag = 'internal scratch']
  %s0 = inlined_call_operand.hbm [shape: f32[8,32], index: 0, kind: input, shape index: {}]
  %s1 = inlined_call_operand.hbm [shape: f32[1,32], index: 1, kind: input, shape index: {}]
  %s2 = inlined_call_operand.vmem [shape: f32[1,32], index: 2, kind: input, shape index: {}]
  %s3 = inlined_call_operand.hbm [shape: f32[8,32], index: 3, kind: output, shape index: {}]
  %s4 = sld [smem:[#allocation0]]
  $region30: #{tpu_custom_call.1} parent=0
    _
  %s6 = ssub.s32 1, %s4
  %s7 = scalar_select 0, %s6, %s4
  $region1: #{tpu_custom_call.1} parent=0
    #allocation2 [shape = 'u8[4096]{0}', space=vmem, size = 0x1000, scoped, tag = 'input window, operand 0, single buffered']
    #allocation3 [shape = 's32[1]{0}', space=sflag, size = 0x4, scoped, tag = 'scoped memory for tpu_custom_call.1']
    #allocation4 [shape = 's32[1]{0}', space=sflag, size = 0x4, scoped, tag = 'scoped memory for tpu_custom_call.1']
    #allocation5 [shape = 'u8[512]{0}', space=vmem, size = 0x400, scoped, tag = 'input window, operand 1, single buffered']
    #allocation6 [shape = 's32[1]{0}', space=sflag, size = 0x4, scoped, tag = 'scoped memory for tpu_custom_call.1']
    #allocation7 [shape = 'u8[4096]{0}', space=vmem, size = 0x1000, scoped, tag = 'output window, operand 0, single buffered']
    %8 = vsyncpa [#allocation3], 0
    %9 = vsyncpa [#allocation6], 0
    %10 = vsyncpa [#allocation4], 0
    // Predicated region
    $region2: #{tpu_custom_call.1} parent=1 // pred_check
      _
    $region3: #{tpu_custom_call.1} parent=1 // pred_check_branch
      %12 = sbr.rel (0) target = $region5
    $region4: #{tpu_custom_call.1} parent=1 // pred_region
      %14 = vsyncadd [#allocation3], 0
      %s16 = sshll.u32 %s0, 4
      %s17 = int_to_ptr.hbm [resolvable:$true] %s16
      %s18 = sshll.u32 [#allocation2], 4
      %s19 = int_to_ptr.vmem [resolvable:$true] %s18
      %21 = dma.hbm_to_vmem [thread:$0]  %s17, 128, %s19, [#allocation3]
    $region5: #{tpu_custom_call.1} parent=1 // pred_fallthru
      _
    // Predicated region
    $region6: #{tpu_custom_call.1} parent=1 // pred_check
      _
    $region7: #{tpu_custom_call.1} parent=1 // pred_check_branch
      %23 = sbr.rel (0) target = $region9
    $region8: #{tpu_custom_call.1} parent=1 // pred_region
      %25 = vsyncadd [#allocation6], 0
      %s27 = sshll.u32 %s1, 4
      %s28 = int_to_ptr.hbm [resolvable:$true] %s27
      %s29 = sshll.u32 [#allocation5], 4
      %s30 = int_to_ptr.vmem [resolvable:$true] %s29
      %32 = dma.hbm_to_vmem [thread:$0]  %s28, 16, %s30, [#allocation6]
    $region9: #{tpu_custom_call.1} parent=1 // pred_fallthru
      _
    // Predicated region
    $region10: #{tpu_custom_call.1} parent=1 // pred_check
      _
    $region11: #{tpu_custom_call.1} parent=1 // pred_check_branch
      %34 = sbr.rel (0) target = $region13
    $region12: #{tpu_custom_call.1} parent=1 // pred_region
      _
    $region13: #{tpu_custom_call.1} parent=1 // pred_fallthru
      _
    // Predicated region
    $region14: #{tpu_custom_call.1} parent=1 // pred_check
      _
    $region15: #{tpu_custom_call.1} parent=1 // pred_check_branch
      %36 = sbr.rel (0) target = $region17
    $region16: #{tpu_custom_call.1} parent=1 // pred_region
      %38 = dma.done [#allocation3], 128
    $region17: #{tpu_custom_call.1} parent=1 // pred_fallthru
      _
    // Predicated region
    $region18: #{tpu_custom_call.1} parent=1 // pred_check
      _
    $region19: #{tpu_custom_call.1} parent=1 // pred_check_branch
      %40 = sbr.rel (0) target = $region21
    $region20: #{tpu_custom_call.1} parent=1 // pred_region
      %42 = dma.done [#allocation6], 16
    $region21: #{tpu_custom_call.1} parent=1 // pred_fallthru
      _
    %v43 = vld [vmem:[#allocation2] sm:$0xff]
    %vm44 = vcmask 261120
    %v45 = vsel %vm44, %v43, 0.0
    %46 = vadd.xlane.f32.xlu0 %v45
    %v47 = vpop.xlane.xlu0 %46
    %v48 = vrcp.pop 32.0
    %v49 = vmul.f32 32.0, %v48
    %v50 = vsub.f32 1.0, %v49
    %v51 = vmul.f32 %v48, %v50
    %v52 = vadd.f32 %v48, %v51
    %vm53 = vweird.f32 %v48
    %v54 = vsel %vm53, %v48, %v52
    %v55 = vmul.f32 %v47, %v54
    %v56 = vsub.f32 %v43, %v55
    %v57 = vmul.f32 %v56, %v56
    %v58 = vsel %vm44, %v57, 0.0
    %59 = vadd.xlane.f32.xlu0 %v58
    %v60 = vpop.xlane.xlu0 %59
    %v61 = vmul.f32 %v60, %v54
    %v62 = vadd.f32 %v61, 1e-05
    %v63 = vrsqrt.pop %v62
    %v64 = vmul.f32 %v63, %v62
    %v65 = vmul.f32 %v64, %v63
    %v66 = vmul.f32 0.5, %v65
    %v67 = vsub.f32 1.5, %v66
    %v68 = vmul.f32 %v63, %v67
    %vm69 = vweird.f32 %v62
    %vm70 = vweird.f32 %v63
    %vm71 = vmor %vm69, %vm70
    %v72 = vsel %vm71, %v63, %v68
    %v73 = vld [vmem:[#allocation5] sm:$0x1]
    %v74 = vld [vmem:[%s2] sm:$0x1]
    %v75 = vmul.f32 %v56, %v72
    %v77 = vperm.slane %v73, 0
    %v79 = vmul.f32 %v75, %v77
    %v81 = vperm.slane %v74, 0
    %v83 = vadd.f32 %v79, %v81
    %84 = vst.msk [vmem:[#allocation7] sm:$0xff] %vm44, %v83
    // Predicated region
    $region22: #{tpu_custom_call.1} parent=1 // pred_check
      _
    $region23: #{tpu_custom_call.1} parent=1 // pred_check_branch
      %86 = sbr.rel (0) target = $region25
    $region24: #{tpu_custom_call.1} parent=1 // pred_region
      %88 = vsyncadd [#allocation4], 0
      %s90 = sshll.u32 [#allocation7], 4
      %s91 = int_to_ptr.vmem [resolvable:$true] %s90
      %s92 = sshll.u32 %s3, 4
      %s93 = int_to_ptr.hbm [resolvable:$true] %s92
      %95 = dma.vmem_to_hbm [thread:$0]  %s91, 128, %s93, [#allocation4]
    $region25: #{tpu_custom_call.1} parent=1 // pred_fallthru
      _
    // Predicated region
    $region26: #{tpu_custom_call.1} parent=1 // pred_check
      _
    $region27: #{tpu_custom_call.1} parent=1 // pred_check_branch
      %97 = sbr.rel (0) target = $region29
    $region28: #{tpu_custom_call.1} parent=1 // pred_region
      %99 = dma.done [#allocation4], 128
    $region29: #{tpu_custom_call.1} parent=1 // pred_fallthru
      _
    %100 = vsyncpa [#allocation3], 1
    %101 = vsyncpa [#allocation6], 1
    %102 = vsyncpa [#allocation4], 1

</llo_original>
